<compile_context>
chip_gen: v7x
topology: tpu7x:2x2x1
jax: 0.10.0
libtpu: 0.0.40
codegen_flags: <defaults>
</compile_context>

<pallas_src>
import functools

import jax
import jax.numpy as jnp
from jax.experimental import pallas as pl
from jax.experimental.pallas import tpu as pltpu


def _round_up(x, m):
    return (x + m - 1) // m * m


# ----------------------------------------------------------------------------
# Pallas kernel: all GCN layers of one level, fused.
# grid = (num_layers, num_row_tiles); layer axis outer (sequential dependency),
# A_hat row tiles inner.
# ----------------------------------------------------------------------------
def _gcn_level_kernel(x_hbm, a_ref, w_ref, b_ref, o_ref, h_ref, xw_ref,
                      *, num_layers, tm, a_resident):
    l = pl.program_id(0)
    i = pl.program_id(1)
    row0 = pl.multiple_of(i * tm, tm)

    # Load the input features into the resident H buffer once, at the start.
    # X is an un-pipelined HBM ref -> single manual DMA, no double buffer.
    @pl.when(jnp.logical_and(l == 0, i == 0))
    def _():
        pltpu.sync_copy(x_hbm, h_ref)

    # XW = H @ W_l computed once per layer (first row tile) and kept resident
    # in VMEM so every A_hat row tile reuses it (no redundant feature GEMM).
    # NOTE: XW is rounded to bf16 here; accuracy is bounded by the bf16
    # operand rounding anyway and stays within the validation tolerance.
    @pl.when(i == 0)
    def _():
        xw = jnp.dot(h_ref[...], w_ref[0],
                     preferred_element_type=jnp.float32)
        xw_ref[...] = xw.astype(xw_ref.dtype)

    # Row tile of the aggregation: A_hat[tile, :] @ XW on the MXU (f32 acc),
    # then bias add on the VPU.
    if a_resident:
        # A_hat is fully resident in VMEM (constant block index -> one DMA).
        if a_ref.shape[0] == tm:
            a_tile = a_ref[...]
        else:
            a_tile = a_ref[pl.ds(row0, tm), :]
    else:
        a_tile = a_ref[...]
    out = jnp.dot(a_tile, xw_ref[...], preferred_element_type=jnp.float32)
    out = out + b_ref[0]

    # Hidden layers: ReLU (dropout == identity in eval) and write the tile
    # back into the resident H buffer for the next layer.  H is only read
    # through XW (computed at i == 0), so in-place update is safe.
    # NOTE: padded node rows (>= num_nodes) accumulate relu(b_l); they never
    # contaminate real rows (A's padded columns are zero) and are sliced off.
    @pl.when(l < num_layers - 1)
    def _():
        h_ref[pl.ds(row0, tm), :] = jnp.maximum(out, 0.0).astype(h_ref.dtype)

    # Constant-index output block: filled only on the last layer and written
    # back to HBM exactly once, at the end of the grid.
    @pl.when(l == num_layers - 1)
    def _():
        o_ref[pl.ds(row0, tm), :] = out.astype(o_ref.dtype)


# ----------------------------------------------------------------------------
# Wrapper: pad / cast operands and launch the fused level kernel.
# ----------------------------------------------------------------------------
def gcn_level_forward(a_hat, x, weights, biases, *, hid_dim):
    """All GCN layers of one encoder level in a single fused pallas_call.

    a_hat:   [N, N]  dense normalized adjacency (f32)
    x:       [N, F]  node features (f32)
    weights: list of [F_in_l, F_out_l] (f32)
    biases:  list of [1, F_out_l] (f32)
    returns: [N, hid_dim] f32
    """
    num_nodes = x.shape[0]
    num_layers = len(weights)

    # Lane-pad the feature axis to a multiple of 128 (zero padding is exact).
    fpad = 128
    for w in weights:
        fpad = max(fpad, _round_up(w.shape[0], 128), _round_up(w.shape[1], 128))

    # Node axis padded to a multiple of 128: it is the lane dim of A tiles and
    # the sublane dim of bf16 H/XW, so 128-alignment avoids masked accesses.
    n_pad = _round_up(num_nodes, 128)

    # Row tile: largest of {512, 256, 128} that divides n_pad.
    tm = 512 if n_pad % 512 == 0 else (256 if n_pad % 256 == 0 else 128)
    num_row_tiles = n_pad // tm

    # VMEM budget (conservative: count 2 buffers for pipelined operands).
    def vmem_bytes(resident):
        a_b = n_pad * n_pad * 2 * 2 if resident else tm * n_pad * 2 * 3
        return (a_b
                + fpad * fpad * 2 * 2          # W_l (bf16, double buffered)
                + fpad * 4 * 2                 # b_l (f32)
                + n_pad * fpad * 4 * 2         # constant-index f32 output
                + 2 * n_pad * fpad * 2)        # resident H + XW scratch
    a_resident = vmem_bytes(True) <= (48 << 20)   # safe on v5e/v6e/v7x
    total_vmem = vmem_bytes(a_resident)
    vmem_limit = int(min(max(total_vmem + (8 << 20), 32 << 20), 100 << 20))

    # bf16 inputs, f32 accumulation inside the kernel; bias kept f32.
    a_p = jnp.zeros((n_pad, n_pad), jnp.bfloat16)
    a_p = a_p.at[:num_nodes, :num_nodes].set(a_hat.astype(jnp.bfloat16))
    x_p = jnp.zeros((n_pad, fpad), jnp.bfloat16)
    x_p = x_p.at[:num_nodes, :x.shape[1]].set(x.astype(jnp.bfloat16))
    w_stack = jnp.stack([
        jnp.zeros((fpad, fpad), jnp.bfloat16)
        .at[:w.shape[0], :w.shape[1]].set(w.astype(jnp.bfloat16))
        for w in weights])
    b_stack = jnp.stack([
        jnp.zeros((1, fpad), jnp.float32)
        .at[:, :b.shape[1]].set(b.astype(jnp.float32))
        for b in biases])

    if a_resident:
        a_spec = pl.BlockSpec((n_pad, n_pad), lambda l, i: (0, 0))
    else:
        # Streamed A: keep three buffers in flight so the HBM stream stays
        # saturated across the i==0 XW GEMM and layer-boundary block switches.
        a_spec = pl.BlockSpec((tm, n_pad), lambda l, i: (i, 0),
                              pipeline_mode=pl.Buffered(3))

    kernel = functools.partial(_gcn_level_kernel, num_layers=num_layers,
                               tm=tm, a_resident=a_resident)

    a_reads = 1 if a_resident else num_layers
    flops = num_layers * (2 * n_pad * fpad * fpad + 2 * n_pad * n_pad * fpad)
    bytes_accessed = (a_p.size * 2 * a_reads + x_p.size * 2 +
                      w_stack.size * 2 + b_stack.size * 4 + n_pad * fpad * 4)

    out = pl.pallas_call(
        kernel,
        out_shape=jax.ShapeDtypeStruct((n_pad, fpad), jnp.float32),
        grid_spec=pltpu.PrefetchScalarGridSpec(
            num_scalar_prefetch=0,
            grid=(num_layers, num_row_tiles),
            in_specs=[
                pl.BlockSpec(memory_space=pl.ANY),                      # X (HBM)
                a_spec,                                                 # A_hat
                pl.BlockSpec((1, fpad, fpad), lambda l, i: (l, 0, 0)),  # W_l
                pl.BlockSpec((1, 1, fpad), lambda l, i: (l, 0, 0)),     # b_l
            ],
            out_specs=pl.BlockSpec((n_pad, fpad), lambda l, i: (0, 0)),
            scratch_shapes=[
                pltpu.VMEM((n_pad, fpad), jnp.bfloat16),  # resident H
                pltpu.VMEM((n_pad, fpad), jnp.bfloat16),  # resident XW
            ]),
        compiler_params=pltpu.CompilerParams(
            # Layer axis is strictly sequential; row tiles share the resident
            # XW/H scratch computed at i == 0, so both stay "arbitrary".
            dimension_semantics=("arbitrary", "arbitrary"),
            vmem_limit_bytes=vmem_limit),
        cost_estimate=pl.CostEstimate(
            flops=flops, transcendentals=0, bytes_accessed=bytes_accessed),
    )(x_p, a_p, w_stack, b_stack)

    return out[:num_nodes, :hid_dim]


# ----------------------------------------------------------------------------
# Glue: dense normalized adjacency (torch_geometric gcn_norm semantics)
# ----------------------------------------------------------------------------
def gcn_norm_dense(edge_index, edge_weight, num_nodes):
    row, col = edge_index[0], edge_index[1]
    # M[dst, src] accumulates edge weights (aggregation pulls from sources).
    m = jnp.zeros((num_nodes, num_nodes), jnp.float32)
    m = m.at[col, row].add(edge_weight.astype(jnp.float32))
    # Self-loops with weight 1 (PyG add_self_loops fill_value=1.0).
    m = m + jnp.eye(num_nodes, dtype=jnp.float32)
    deg = jnp.sum(m, axis=1)
    dinv = jnp.where(deg > 0.0, 1.0 / jnp.sqrt(deg), 0.0)
    return dinv[:, None] * m * dinv[None, :]


# ----------------------------------------------------------------------------
# Encoder (parameters initialized deterministically in-script)
# ----------------------------------------------------------------------------
def _glorot(key, shape):
    fan_in, fan_out = shape
    limit = jnp.sqrt(6.0 / (fan_in + fan_out))
    return jax.random.uniform(key, shape, jnp.float32, -limit, limit)


class Encoder:
    def __init__(self, feat_dim, hid_dim, agg_gnn, drop_ratio, num_levels,
                 encoder_layers, *, key):
        assert agg_gnn == "GCN", "only the GCN branch is implemented"
        self.feat_dim = feat_dim
        self.hid_dim = hid_dim
        self.agg_gnn = agg_gnn
        self.drop_ratio = drop_ratio
        self.num_levels = num_levels
        self.encoder_layers = encoder_layers
        self.training = False

        self.convs = []  # convs[level][layer] = (W, b)
        for level in range(num_levels):
            level_convs = []
            for layer in range(encoder_layers):
                if (level == 0) and (layer == 0):
                    in_dim, out_dim = feat_dim, hid_dim
                else:
                    in_dim, out_dim = hid_dim, hid_dim
                key, wkey = jax.random.split(key)
                w = _glorot(wkey, (in_dim, out_dim))
                b = jnp.zeros((1, out_dim), jnp.float32)
                level_convs.append((w, b))
            self.convs.append(level_convs)

    def forward(self, x, level, edge_index, edge_weight):
        num_nodes = x.shape[0]
        a_hat = gcn_norm_dense(edge_index, edge_weight, num_nodes)
        weights = [w for (w, _) in self.convs[level]]
        biases = [b for (_, b) in self.convs[level]]
        return gcn_level_forward(a_hat, x.astype(jnp.float32), weights, biases,
                                 hid_dim=self.hid_dim)


# ----------------------------------------------------------------------------
# Pure-JAX reference (f32) for validation.
# ----------------------------------------------------------------------------
def _reference_forward(a_hat, x, weights, biases):
    h = x.astype(jnp.float32)
    for idx, (w, b) in enumerate(zip(weights, biases)):
        h = a_hat @ (h @ w) + b
        if idx < len(weights) - 1:
            h = jnp.maximum(h, 0.0)
    return h


# ----------------------------------------------------------------------------
# Main
# ----------------------------------------------------------------------------
if __name__ == "__main__":
    key = jax.random.PRNGKey(0)
    k_src, k_dst, k_w, k_x, k_params = jax.random.split(key, 5)

    num_nodes = 16
    feat_dim = 32
    hid_dim = 32
    num_levels = 2
    encoder_layers = 2
    drop_ratio = 0.5
    num_edges = 48

    src = jax.random.randint(k_src, (num_edges,), 0, num_nodes, dtype=jnp.int32)
    dst = jax.random.randint(k_dst, (num_edges,), 0, num_nodes, dtype=jnp.int32)
    edge_index = jnp.stack([src, dst], axis=0)                 # [2, E]
    edge_weight = jax.random.uniform(k_w, (num_edges,),
                                     minval=0.5, maxval=1.5)   # [E]
    x = jax.random.normal(k_x, (num_nodes, feat_dim), jnp.float32)  # [N, F]

    enc = Encoder(feat_dim, hid_dim, "GCN", drop_ratio, num_levels,
                  encoder_layers, key=k_params)

    out0 = enc.forward(x, level=0, edge_index=edge_index,
                       edge_weight=edge_weight)
    out0 = jax.block_until_ready(out0)
    out1 = enc.forward(out0, level=1, edge_index=edge_index,
                       edge_weight=edge_weight)
    out1 = jax.block_until_ready(out1)

    assert out0.shape == (num_nodes, hid_dim)
    assert out1.shape == (num_nodes, hid_dim)
    assert bool(jnp.all(jnp.isfinite(out0)))
    assert bool(jnp.all(jnp.isfinite(out1)))

    # Validate against the f32 pure-JAX reference (bf16 inputs -> loose tol).
    a_hat = gcn_norm_dense(edge_index, edge_weight, num_nodes)
    ref0 = _reference_forward(a_hat, x,
                              [w for (w, _) in enc.convs[0]],
                              [b for (_, b) in enc.convs[0]])
    assert bool(jnp.allclose(out0, ref0, rtol=5e-2, atol=5e-2)), (
        float(jnp.max(jnp.abs(out0 - ref0))))

    print("KERNEL_OK")
</pallas_src>

<mosaic_0001>
module attributes {stable_mosaic.version = 11 : i64} {
  func.func @_gcn_level_kernel(%arg0: i32, %arg1: i32, %arg2: memref<128x128xbf16, #tpu.memory_space<any>>, %arg3: memref<128x128xbf16, #tpu.memory_space<vmem>>, %arg4: memref<1x128x128xbf16, #tpu.memory_space<vmem>>, %arg5: memref<1x1x128xf32, #tpu.memory_space<vmem>>, %arg6: memref<128x128xf32, #tpu.memory_space<vmem>>, %arg7: memref<128x128xbf16, #tpu.memory_space<vmem>>, %arg8: memref<128x128xbf16, #tpu.memory_space<vmem>>) attributes {dimension_semantics = [#tpu.dimension_semantics<arbitrary>, #tpu.dimension_semantics<arbitrary>], iteration_bounds = array<i64: 2, 1>, scalar_prefetch = 0 : i64, scratch_operands = 2 : i64, tpu.core_type = #tpu.core_type<tc>, window_params = [{}, {pipeline_mode = #tpu.pipeline_mode<synchronous>, transform_indices = @transform_1, window_bounds = array<i64: 128, 128>}, {transform_indices = @transform_2, window_bounds = array<i64: 1, 128, 128>}, {transform_indices = @transform_3, window_bounds = array<i64: 1, 1, 128>}, {pipeline_mode = #tpu.pipeline_mode<synchronous>, transform_indices = @transform_4, window_bounds = array<i64: 128, 128>}]} {
    %c128_i32 = arith.constant 128 : i32
    %0 = arith.muli %arg1, %c128_i32 : i32
    %1 = tpu.assume_multiple %0, 128 : i32
    %c0_i32 = arith.constant 0 : i32
    %2 = arith.cmpi eq, %arg0, %c0_i32 : i32
    %c0_i32_0 = arith.constant 0 : i32
    %3 = arith.cmpi eq, %arg1, %c0_i32_0 : i32
    %4 = arith.andi %2, %3 : i1
    %5 = arith.extui %4 : i1 to i32
    %c0_i32_1 = arith.constant 0 : i32
    %6 = arith.cmpi ne, %5, %c0_i32_1 : i32
    scf.if %6 {
      "tpu.region"() ({
        %23 = tpu.sem_alloc : memref<!tpu.dma_semaphore, #tpu.memory_space<semaphore_mem>>
        tpu.enqueue_dma source(%arg2 : memref<128x128xbf16, #tpu.memory_space<any>>) target(%arg7 : memref<128x128xbf16, #tpu.memory_space<vmem>>) target_semaphore(%23 : memref<!tpu.dma_semaphore, #tpu.memory_space<semaphore_mem>>)
        tpu.wait_dma2 semaphore(%23 : memref<!tpu.dma_semaphore, #tpu.memory_space<semaphore_mem>>) src(%arg2 : memref<128x128xbf16, #tpu.memory_space<any>>) dst(%arg7 : memref<128x128xbf16, #tpu.memory_space<vmem>>)
        tpu.yield
      }) : () -> ()
    } else {
    }
    %c0_i32_2 = arith.constant 0 : i32
    %7 = arith.cmpi eq, %arg1, %c0_i32_2 : i32
    %8 = arith.extui %7 : i1 to i32
    %c0_i32_3 = arith.constant 0 : i32
    %9 = arith.cmpi ne, %8, %c0_i32_3 : i32
    scf.if %9 {
      %c0_13 = arith.constant 0 : index
      %c0_14 = arith.constant 0 : index
      %23 = vector.load %arg7[%c0_13, %c0_14] : memref<128x128xbf16, #tpu.memory_space<vmem>>, vector<128x128xbf16>
      %c0_15 = arith.constant 0 : index
      %c0_16 = arith.constant 0 : index
      %c0_17 = arith.constant 0 : index
      %24 = vector.load %arg4[%c0_15, %c0_16, %c0_17] : memref<1x128x128xbf16, #tpu.memory_space<vmem>>, vector<1x128x128xbf16>
      %25 = vector.shape_cast %24 : vector<1x128x128xbf16> to vector<128x128xbf16>
      %cst_18 = arith.constant dense<0.000000e+00> : vector<128x128xf32>
      %26 = tpu.matmul %23, %25, %cst_18 {dimension_numbers = #tpu.dot_dimension_numbers<[1], [0], [0], [1], [0, 0, 1, 1], [], []>} : vector<128x128xbf16>, vector<128x128xbf16>, vector<128x128xf32> -> vector<128x128xf32>
      %27 = arith.truncf %26 : vector<128x128xf32> to vector<128x128xbf16>
      %c0_19 = arith.constant 0 : index
      %c0_20 = arith.constant 0 : index
      %28 = vector.load %arg8[%c0_19, %c0_20] : memref<128x128xbf16, #tpu.memory_space<vmem>>, vector<128x128xbf16>
      tpu.vector_store %arg8[%c0_19, %c0_20], %27 {strides = array<i32>} : memref<128x128xbf16, #tpu.memory_space<vmem>>, vector<128x128xbf16>,
    } else {
    }
    %c0 = arith.constant 0 : index
    %c0_4 = arith.constant 0 : index
    %10 = vector.load %arg3[%c0, %c0_4] : memref<128x128xbf16, #tpu.memory_space<vmem>>, vector<128x128xbf16>
    %c0_5 = arith.constant 0 : index
    %c0_6 = arith.constant 0 : index
    %11 = vector.load %arg8[%c0_5, %c0_6] : memref<128x128xbf16, #tpu.memory_space<vmem>>, vector<128x128xbf16>
    %cst = arith.constant dense<0.000000e+00> : vector<128x128xf32>
    %12 = tpu.matmul %10, %11, %cst {dimension_numbers = #tpu.dot_dimension_numbers<[1], [0], [0], [1], [0, 0, 1, 1], [], []>} : vector<128x128xbf16>, vector<128x128xbf16>, vector<128x128xf32> -> vector<128x128xf32>
    %c0_7 = arith.constant 0 : index
    %c0_8 = arith.constant 0 : index
    %c0_9 = arith.constant 0 : index
    %13 = vector.load %arg5[%c0_7, %c0_8, %c0_9] : memref<1x1x128xf32, #tpu.memory_space<vmem>>, vector<1x1x128xf32>
    %14 = vector.shape_cast %13 : vector<1x1x128xf32> to vector<1x128xf32>
    %15 = vector.broadcast %14 : vector<1x128xf32> to vector<128x128xf32>
    %16 = arith.addf %12, %15 : vector<128x128xf32>
    %c1_i32 = arith.constant 1 : i32
    %17 = arith.cmpi slt, %arg0, %c1_i32 : i32
    %18 = arith.extui %17 : i1 to i32
    %c0_i32_10 = arith.constant 0 : i32
    %19 = arith.cmpi ne, %18, %c0_i32_10 : i32
    scf.if %19 {
      %cst_13 = arith.constant 0.000000e+00 : f32
      %23 = vector.broadcast %cst_13 : f32 to vector<128x128xf32>
      %24 = arith.maximumf %16, %23 : vector<128x128xf32>
      %25 = arith.truncf %24 : vector<128x128xf32> to vector<128x128xbf16>
      %26 = arith.index_cast %1 : i32 to index
      %c0_14 = arith.constant 0 : index
      %27 = vector.load %arg7[%26, %c0_14] : memref<128x128xbf16, #tpu.memory_space<vmem>>, vector<128x128xbf16>
      tpu.vector_store %arg7[%26, %c0_14], %25 {strides = array<i32>} : memref<128x128xbf16, #tpu.memory_space<vmem>>, vector<128x128xbf16>,
    } else {
    }
    %c1_i32_11 = arith.constant 1 : i32
    %20 = arith.cmpi eq, %arg0, %c1_i32_11 : i32
    %21 = arith.extui %20 : i1 to i32
    %c0_i32_12 = arith.constant 0 : i32
    %22 = arith.cmpi ne, %21, %c0_i32_12 : i32
    scf.if %22 {
      %23 = arith.index_cast %1 : i32 to index
      %c0_13 = arith.constant 0 : index
      %24 = vector.load %arg6[%23, %c0_13] : memref<128x128xf32, #tpu.memory_space<vmem>>, vector<128x128xf32>
      tpu.vector_store %arg6[%23, %c0_13], %16 {strides = array<i32>} : memref<128x128xf32, #tpu.memory_space<vmem>>, vector<128x128xf32>,
    } else {
    }
    return
  }
  func.func @transform_1(%arg0: i32, %arg1: i32) -> (i32, i32) {
    %c0_i32 = arith.constant 0 : i32
    %c0_i32_0 = arith.constant 0 : i32
    %c0_i32_1 = arith.constant 0 : i32
    return %c0_i32, %c0_i32_0 : i32, i32
  }
  func.func @transform_2(%arg0: i32, %arg1: i32) -> (i32, i32, i32) {
    %c0_i32 = arith.constant 0 : i32
    %c0_i32_0 = arith.constant 0 : i32
    %c0_i32_1 = arith.constant 0 : i32
    return %arg0, %c0_i32, %c0_i32_0 : i32, i32, i32
  }
  func.func @transform_3(%arg0: i32, %arg1: i32) -> (i32, i32, i32) {
    %c0_i32 = arith.constant 0 : i32
    %c0_i32_0 = arith.constant 0 : i32
    %c0_i32_1 = arith.constant 0 : i32
    return %arg0, %c0_i32, %c0_i32_0 : i32, i32, i32
  }
  func.func @transform_4(%arg0: i32, %arg1: i32) -> (i32, i32) {
    %c0_i32 = arith.constant 0 : i32
    %c0_i32_0 = arith.constant 0 : i32
    %c0_i32_1 = arith.constant 0 : i32
    return %c0_i32, %c0_i32_0 : i32, i32
  }
}

</mosaic_0001>

<llo_original>
// kernel: tpu_custom_call.1
$region0: #{tpu_custom_call.1}
  #allocation0 [shape = 'u32[]', space=smem, size = 0x4, offset = 0x4, fixed_abs, tag = 'smem constant byte address 0x4 - core index']
  #allocation1 [shape = 'u32[144,128]{1,0:T(1,128)}', space=vmem, size = 0x12000, scoped, tag = 'internal scratch']
  #allocation2 [shape = 'bf16[128,128]{1,0:T(16,128)(2,1)}', space=vmem, size = 0x8000, scoped, tag = 'scratch operand']
  #allocation3 [shape = 'bf16[128,128]{1,0:T(16,128)(2,1)}', space=vmem, size = 0x8000, scoped, tag = 'scratch operand']
  #allocation11 [shape = 's32[]', space=sflag, size = 0x4, offset = 0, fixed_abs, tag = 'sflag constant byte address 0x0 - dummy sync flag']
  #allocation12 [shape = 's32[]', space=sflag, size = 0x4, offset = 0, fixed_abs, tag = 'sflag constant byte address 0x0 - dummy sync flag']
  #allocation13 [shape = 'u32[]', space=smem, size = 0x4, offset = 0x44, fixed_abs, tag = 'smem constant byte address 0x44 - assertion arg 0']
  #allocation14 [shape = 'u32[]', space=smem, size = 0x4, offset = 0x48, fixed_abs, tag = 'smem constant byte address 0x48 - assertion arg 1']
  %s0 = inlined_call_operand.hbm [shape: bf16[128,128], index: 0, kind: input, shape index: {}]
  %s1 = inlined_call_operand.hbm [shape: bf16[128,128], index: 1, kind: input, shape index: {}]
  %s2 = inlined_call_operand.hbm [shape: bf16[2,128,128], index: 2, kind: input, shape index: {}]
  %s3 = inlined_call_operand.vmem [shape: f32[2,1,128], index: 3, kind: input, shape index: {}]
  %s4 = inlined_call_operand.hbm [shape: f32[128,128], index: 4, kind: output, shape index: {}]
  %s5 = sld [smem:[#allocation0]]
  $region74: #{tpu_custom_call.1} parent=0
    _
  %s7 = ssub.s32 1, %s5
  %s8 = scalar_select 0, %s7, %s5
  $region1: #{tpu_custom_call.1} parent=0
    #allocation4 [shape = 'u8[32768]{0}', space=vmem, size = 0x8000, scoped, tag = 'input window, operand 1, single buffered']
    #allocation5 [shape = 's32[2]{0}', space=sflag, size = 0x8, scoped, tag = 'scoped memory for tpu_custom_call.1']
    #allocation6 [shape = 's32[2]{0}', space=sflag, size = 0x8, scoped, tag = 'scoped memory for tpu_custom_call.1']
    #allocation7 [shape = 'u8[65536]{0}', space=vmem, size = 0x10000, scoped, tag = 'input window, operand 2']
    #allocation8 [shape = 's32[2]{0}', space=sflag, size = 0x8, scoped, tag = 'scoped memory for tpu_custom_call.1']
    #allocation9 [shape = 'u8[65536]{0}', space=vmem, size = 0x10000, scoped, tag = 'output window, operand 0, single buffered']
    %9 = vsyncpa [#allocation5], 0
    %10 = vsyncpa [#allocation8], 0
    %s11 = scalar_lea.sflag [#allocation8], 1
    %12 = vsyncpa %s11, 0
    %13 = vsyncpa [#allocation6], 0
    loop: start=0, step=1, limit=4
    $region2: #{tpu_custom_call.1} parent=1 // loop_pre_header
      _
    $region3: #{tpu_custom_call.1} parent=1 // loop_header
      %s15 = sphi 0, %s19
      %p16 = scmp.ge.s32.totalorder %s15, 4
      %s22 = sphi 0, %s34
      %s23 = sphi 0, %s30
      %s24 = sphi 0, %s22
      %s25 = sphi 0, %s23
      %s26 = sphi 0, %s24
      %s27 = sphi 0, %s25
      %s35 = sphi 0, %s35
      %s37 = sphi 0, %s35
      %s38 = sphi 0, %s37
      %s52 = sphi 0, %s38
      %s58 = sphi 0, %s60
      %s61 = sphi 0, %s58
      %s62 = sphi 0, %s61
      %s78 = sphi 0, %s62
      %s84 = sphi 0, %s86
      %s87 = sphi 0, %s84
      %s88 = sphi 0, %s87
      %s104 = sphi 0, %s88
      %s108 = sphi 0, %s108
      %s110 = sphi 0, %s108
      %s111 = sphi 0, %s110
      %s125 = sphi 0, %s111
    $region4: #{tpu_custom_call.1} parent=1 // loop_header_branch
      %18 = sbr.rel (%p16) target = $region8
    $region5: #{tpu_custom_call.1} parent=1 // loop_body
      %s20 = ssub.s32 %s15, 1
      %s21 = ssub.s32 %s15, 2
      %s28 = sadd.s32 1, %s23
      %p29 = scmp.ge.s32.totalorder %s28, 1
      %s30 = scalar_select %p29, 0, %s28
      %s31 = sadd.s32 1, %s22
      %s32 = scalar_select %p29, %s31, %s22
      %p33 = scmp.ge.s32.totalorder %s32, 2
      %s34 = scalar_select %p33, 0, %s32
      %s36 = sadd.s32 %s35, 1
      %p39 = scmp.eq.s32.totalorder %s15, 1
      %p40 = scmp.ne.s32.totalorder %s35, %s37
      %p41 = scmp.eq.s32.totalorder %s15, 0
      %p42 = por %p40, %p41
      %p43 = scmp.ne.s32.totalorder %s35, %s37
      %p44 = scmp.eq.s32.totalorder %s20, 1
      %p45 = por %p43, %p44
      %p46 = scmp.ne.s32.totalorder %s37, %s38
      %p47 = scmp.eq.s32.totalorder %s20, 0
      %p48 = por %p46, %p47
      %p49 = scmp.ne.s32.totalorder %s37, %s38
      %p50 = scmp.eq.s32.totalorder %s21, 1
      %p51 = por %p49, %p50
      %p53 = scmp.ne.s32.totalorder %s38, %s52
      %p54 = scmp.eq.s32.totalorder %s21, 0
      %p55 = por %p53, %p54
      %s56 = ssub.s32 %s22, %s34
      %p57 = scmp.eq.s32.totalorder %s56, 0
      %s59 = sadd.s32 %s58, 1
      %s60 = scalar_select %p57, %s58, %s59
      %p63 = pneg %p57
      %p64 = scmp.eq.s32.totalorder %s15, 1
      %p65 = por %p63, %p64
      %p66 = scmp.ne.s32.totalorder %s58, %s61
      %p67 = scmp.eq.s32.totalorder %s15, 0
      %p68 = por %p66, %p67
      %p69 = scmp.ne.s32.totalorder %s58, %s61
      %p70 = scmp.eq.s32.totalorder %s20, 1
      %p71 = por %p69, %p70
      %p72 = scmp.ne.s32.totalorder %s61, %s62
      %p73 = scmp.eq.s32.totalorder %s20, 0
      %p74 = por %p72, %p73
      %p75 = scmp.ne.s32.totalorder %s61, %s62
      %p76 = scmp.eq.s32.totalorder %s21, 1
      %p77 = por %p75, %p76
      %p79 = scmp.ne.s32.totalorder %s62, %s78
      %p80 = scmp.eq.s32.totalorder %s21, 0
      %p81 = por %p79, %p80
      %s82 = ssub.s32 %s22, %s34
      %p83 = scmp.eq.s32.totalorder %s82, 0
      %s85 = sadd.s32 %s84, 1
      %s86 = scalar_select %p83, %s84, %s85
      %p89 = pneg %p83
      %p90 = scmp.eq.s32.totalorder %s15, 1
      %p91 = por %p89, %p90
      %p92 = scmp.ne.s32.totalorder %s84, %s87
      %p93 = scmp.eq.s32.totalorder %s15, 0
      %p94 = por %p92, %p93
      %p95 = scmp.ne.s32.totalorder %s84, %s87
      %p96 = scmp.eq.s32.totalorder %s20, 1
      %p97 = por %p95, %p96
      %p98 = scmp.ne.s32.totalorder %s87, %s88
      %p99 = scmp.eq.s32.totalorder %s20, 0
      %p100 = por %p98, %p99
      %p101 = scmp.ne.s32.totalorder %s87, %s88
      %p102 = scmp.eq.s32.totalorder %s21, 1
      %p103 = por %p101, %p102
      %p105 = scmp.ne.s32.totalorder %s88, %s104
      %p106 = scmp.eq.s32.totalorder %s21, 0
      %p107 = por %p105, %p106
      %s109 = sadd.s32 %s108, 1
      %p112 = scmp.eq.s32.totalorder %s15, 1
      %p113 = scmp.ne.s32.totalorder %s108, %s110
      %p114 = scmp.eq.s32.totalorder %s15, 0
      %p115 = por %p113, %p114
      %p116 = scmp.ne.s32.totalorder %s108, %s110
      %p117 = scmp.eq.s32.totalorder %s20, 1
      %p118 = por %p116, %p117
      %p119 = scmp.ne.s32.totalorder %s110, %s111
      %p120 = scmp.eq.s32.totalorder %s20, 0
      %p121 = por %p119, %p120
      %p122 = scmp.ne.s32.totalorder %s110, %s111
      %p123 = scmp.eq.s32.totalorder %s21, 1
      %p124 = por %p122, %p123
      %p126 = scmp.ne.s32.totalorder %s111, %s125
      %p127 = scmp.eq.s32.totalorder %s21, 0
      %p128 = por %p126, %p127
      %p129 = scmp.le.s32.totalorder 1, %s15
      %p130 = scmp.lt.s32.totalorder %s15, 3
      %p131 = pnand %p129, %p130
      %p132 = pneg %p131
      // Predicated region
      $region9: #{tpu_custom_call.1} parent=5 // pred_check
        _
      $region10: #{tpu_custom_call.1} parent=5 // pred_check_branch
        %134 = sbr.rel (%p131) target = $region12
      $region11: #{tpu_custom_call.1} parent=5 // pred_region
        %s135 = ssub.s32 %s15, 1
        // Predicated region
        $region13: #{tpu_custom_call.1} parent=11 // pred_check
          %p136 = pneg %p48
        $region14: #{tpu_custom_call.1} parent=11 // pred_check_branch
          %138 = sbr.rel (%p136) target = $region16
        $region15: #{tpu_custom_call.1} parent=11 // pred_region
          %s140 = ssub.s32 1024, 1024
          %141 = vsyncadd [#allocation5], %s140
          %s142 = sshll.u32 [#allocation4], 4
          %s143 = int_to_ptr.vmem [resolvable:$true] %s142
          %148 = dma.hbm_to_vmem [thread:$0]  %s1, 1024, %s143, [#allocation5], 64, 64, 4
        $region16: #{tpu_custom_call.1} parent=11 // pred_fallthru
          _
      $region12: #{tpu_custom_call.1} parent=5 // pred_fallthru
        _
      %p149 = scmp.lt.s32.totalorder %s15, 2
      // Predicated region
      $region17: #{tpu_custom_call.1} parent=5 // pred_check
        %p150 = pneg %p149
      $region18: #{tpu_custom_call.1} parent=5 // pred_check_branch
        %152 = sbr.rel (%p150) target = $region20
      $region19: #{tpu_custom_call.1} parent=5 // pred_region
        // Predicated region
        $region21: #{tpu_custom_call.1} parent=19 // pred_check
          %p153 = pneg %p68
        $region22: #{tpu_custom_call.1} parent=19 // pred_check_branch
          %155 = sbr.rel (%p153) target = $region24
        $region23: #{tpu_custom_call.1} parent=19 // pred_region
          %s156 = sand.u32 %s58, 1
          %s157 = scalar_lea.sflag [#allocation8], %s156
          %s158 = sand.u32 %s58, 1
          %s159 = smul.addr %s158, 64
          %s160 = scalar_lea.vmem [#allocation7], %s159
          %s162 = ssub.s32 1024, 1024
          %163 = vsyncadd %s157, %s162
          %s164 = smul.addr %s22, 16
          %s165 = smul.addr %s164, 64
          %s166 = scalar_lea.hbm %s2, %s165
          %s167 = sshll.u32 %s160, 4
          %s168 = int_to_ptr.vmem [resolvable:$true] %s167
          %173 = dma.hbm_to_vmem [thread:$0]  %s166, 1024, %s168, %s157, 64, 64, 4
        $region24: #{tpu_custom_call.1} parent=19 // pred_fallthru
          _
        // Predicated region
        $region25: #{tpu_custom_call.1} parent=19 // pred_check
          %p174 = pneg %p94
        $region26: #{tpu_custom_call.1} parent=19 // pred_check_branch
          %176 = sbr.rel (%p174) target = $region28
        $region27: #{tpu_custom_call.1} parent=19 // pred_region
          %p177 = scmp.lt.s32.totalorder %s22, 1
          %s178 = scalar_select %p177, %s22, 1
          %s179 = scalar_lea.vmem %s3, %s178
        $region28: #{tpu_custom_call.1} parent=19 // pred_fallthru
          _
      $region20: #{tpu_custom_call.1} parent=5 // pred_fallthru
        _
      %p180 = scmp.le.s32.totalorder 1, %s15
      %p181 = scmp.lt.s32.totalorder %s15, 3
      %p182 = pnand %p180, %p181
      %p183 = pneg %p182
      // Predicated region
      $region29: #{tpu_custom_call.1} parent=5 // pred_check
        _
      $region30: #{tpu_custom_call.1} parent=5 // pred_check_branch
        %185 = sbr.rel (%p182) target = $region32
      $region31: #{tpu_custom_call.1} parent=5 // pred_region
        %s186 = ssub.s32 %s15, 1
        // Predicated region
        $region33: #{tpu_custom_call.1} parent=31 // pred_check
          %p187 = pneg %p48
        $region34: #{tpu_custom_call.1} parent=31 // pred_check_branch
          %189 = sbr.rel (%p187) target = $region36
        $region35: #{tpu_custom_call.1} parent=31 // pred_region
          %190 = dma.done [#allocation5], 1024
        $region36: #{tpu_custom_call.1} parent=31 // pred_fallthru
          _
        %s191 = sand.u32 %s61, 1
        %s192 = scalar_lea.sflag [#allocation8], %s191
        %s193 = sand.u32 %s61, 1
        %s194 = smul.addr %s193, 64
        %s195 = scalar_lea.vmem [#allocation7], %s194
        // Predicated region
        $region37: #{tpu_custom_call.1} parent=31 // pred_check
          %p196 = pneg %p74
        $region38: #{tpu_custom_call.1} parent=31 // pred_check_branch
          %198 = sbr.rel (%p196) target = $region40
        $region39: #{tpu_custom_call.1} parent=31 // pred_region
          %199 = dma.done %s192, 1024
        $region40: #{tpu_custom_call.1} parent=31 // pred_fallthru
          _
        %p200 = pneg %p48
        %p201 = pneg %p45
        %s202 = sand.u32 %s61, 1
        %s203 = scalar_lea.sflag [#allocation8], %s202
        %s204 = sand.u32 %s61, 1
        %s205 = smul.addr %s204, 64
        %s206 = scalar_lea.vmem [#allocation7], %s205
        %p207 = pneg %p74
        %p208 = pneg %p71
        %p209 = scmp.lt.s32.totalorder %s24, 1
        %s210 = scalar_select %p209, %s24, 1
        %s211 = scalar_lea.vmem %s3, %s210
        %p212 = pneg %p100
        %p213 = pneg %p97
        %p214 = pneg %p121
        %p215 = pneg %p118
        %p216 = scmp.lt.s32.totalorder %s24, 1
        %s217 = scalar_select %p216, %s24, 1
        %s218 = scalar_lea.vmem %s3, %s217
        %s220 = smul.u32 %s25, 128
        %p221 = scmp.eq.s32.totalorder %s24, 0
        %p222 = scmp.eq.s32.totalorder %s25, 0
        %p223 = pnand %p221, %p222
        %p224 = pneg %p223
        // Predicated region
        $region41: #{tpu_custom_call.1} parent=31 // pred_check
          _
        $region42: #{tpu_custom_call.1} parent=31 // pred_check_branch
          %226 = sbr.rel (%p223) target = $region44
        $region43: #{tpu_custom_call.1} parent=31 // pred_region
          $region45: #{tpu_custom_call.1} parent=43
            #allocation10 [shape = 's32[1]{0}', space=sflag, size = 0x4, scoped, tag = 'scoped memory for tpu_custom_call.1']
            // Predicated region
            $region46: #{tpu_custom_call.1} parent=45 // pred_check
              _
            $region47: #{tpu_custom_call.1} parent=45 // pred_check_branch
              %228 = sbr.rel target = $region49
            $region48: #{tpu_custom_call.1} parent=45 // pred_region
              %229 = sst [smem:[#allocation13]] [#allocation12]
              %230 = sst [smem:[#allocation14]] [#allocation11]
            $region49: #{tpu_custom_call.1} parent=45 // pred_fallthru
              _
            %232 = shalt.err (0)
            %s234 = sshll.u32 [#allocation2], 4
            %s235 = int_to_ptr.vmem [resolvable:$true] %s234
            %237 = dma.hbm_to_vmem [thread:$0]  %s0, 1024, %s235, [#allocation10]
            %s238 = smul.u32 4, 16
            %s239 = smul.u32 %s238, 1
            %s240 = sshll.u32 %s239, 4
            %241 = dma.done [#allocation10], %s240
        $region44: #{tpu_custom_call.1} parent=31 // pred_fallthru
          _
        // Predicated region
        $region50: #{tpu_custom_call.1} parent=31 // pred_check
          %p242 = pneg %p222
        $region51: #{tpu_custom_call.1} parent=31 // pred_check_branch
          %244 = sbr.rel (%p242) target = $region53
        $region52: #{tpu_custom_call.1} parent=31 // pred_region
          %v245 = vld [vmem:[#allocation2] sm:$0xff]
          %v246 = vld [vmem:[#allocation2 + $0x8] sm:$0xff]
          %v247 = vld [vmem:[#allocation2 + $0x10] sm:$0xff]
          %v248 = vld [vmem:[#allocation2 + $0x18] sm:$0xff]
          %v249 = vld [vmem:[#allocation2 + $0x20] sm:$0xff]
          %v250 = vld [vmem:[#allocation2 + $0x28] sm:$0xff]
          %v251 = vld [vmem:[#allocation2 + $0x30] sm:$0xff]
          %v252 = vld [vmem:[#allocation2 + $0x38] sm:$0xff]
          %v253 = vld [vmem:[%s195] sm:$0xf]
          %v254 = vld [vmem:[%s195 + $0x4] sm:$0xf]
          %v255 = vld [vmem:[%s195 + $0x8] sm:$0xf]
          %v256 = vld [vmem:[%s195 + $0xc] sm:$0xf]
          %v257 = vld [vmem:[%s195 + $0x10] sm:$0xf]
          %v258 = vld [vmem:[%s195 + $0x14] sm:$0xf]
          %v259 = vld [vmem:[%s195 + $0x18] sm:$0xf]
          %v260 = vld [vmem:[%s195 + $0x1c] sm:$0xf]
          %v261 = vld [vmem:[%s195 + $0x20] sm:$0xf]
          %v262 = vld [vmem:[%s195 + $0x24] sm:$0xf]
          %v263 = vld [vmem:[%s195 + $0x28] sm:$0xf]
          %v264 = vld [vmem:[%s195 + $0x2c] sm:$0xf]
          %v265 = vld [vmem:[%s195 + $0x30] sm:$0xf]
          %v266 = vld [vmem:[%s195 + $0x34] sm:$0xf]
          %v267 = vld [vmem:[%s195 + $0x38] sm:$0xf]
          %v268 = vld [vmem:[%s195 + $0x3c] sm:$0xf]
          %v285 = vunpack.c.l.b16 %v253
          %v286 = vunpack.c.l.b16 %v254
          %v287 = vunpack.c.l.b16 %v255
          %v288 = vunpack.c.l.b16 %v256
          %v289 = vunpack.c.l.b16 %v257
          %v290 = vunpack.c.l.b16 %v258
          %v291 = vunpack.c.l.b16 %v259
          %v292 = vunpack.c.l.b16 %v260
          %v293 = vunpack.c.l.b16 %v261
          %v294 = vunpack.c.l.b16 %v262
          %v295 = vunpack.c.l.b16 %v263
          %v296 = vunpack.c.l.b16 %v264
          %v297 = vunpack.c.l.b16 %v265
          %v298 = vunpack.c.l.b16 %v266
          %v299 = vunpack.c.l.b16 %v267
          %v300 = vunpack.c.l.b16 %v268
          %v301 = vpack.c.b16 %v286, %v285
          %v302 = vpack.c.b16 %v288, %v287
          %v303 = vpack.c.b16 %v290, %v289
          %v304 = vpack.c.b16 %v292, %v291
          %v305 = vpack.c.b16 %v294, %v293
          %v306 = vpack.c.b16 %v296, %v295
          %v307 = vpack.c.b16 %v298, %v297
          %v308 = vpack.c.b16 %v300, %v299
          %317 = vmatprep.subr.bf16.mxu0 0
          %318 = vmatpush1.bf16.msra.mxu0 %v301
          %319 = vmatprep.subr.bf16.mxu0 0
          %320 = vmatpush1.bf16.msra.mxu0 %v302
          %321 = vmatprep.subr.bf16.mxu0 0
          %322 = vmatpush1.bf16.msra.mxu0 %v303
          %323 = vmatprep.subr.bf16.mxu0 0
          %324 = vmatpush1.bf16.msra.mxu0 %v304
          %325 = vmatprep.subr.bf16.mxu0 0
          %326 = vmatpush1.bf16.msra.mxu0 %v305
          %327 = vmatprep.subr.bf16.mxu0 0
          %328 = vmatpush1.bf16.msra.mxu0 %v306
          %329 = vmatprep.subr.bf16.mxu0 0
          %330 = vmatpush1.bf16.msra.mxu0 %v307
          %331 = vmatprep.subr.bf16.mxu0 0
          %332 = vmatpush1.bf16.msra.mxu0 %v308
          %333 = vmatprep.subr.bf16.mxu0 0
          %334 = vmatpush1.bf16.msra.mxu0 0
          %335 = vmatprep.subr.bf16.mxu0 0
          %336 = vmatpush1.bf16.msra.mxu0 0
          %337 = vmatprep.subr.bf16.mxu0 0
          %338 = vmatpush1.bf16.msra.mxu0 0
          %339 = vmatprep.subr.bf16.mxu0 0
          %340 = vmatpush1.bf16.msra.mxu0 0
          %341 = vmatprep.subr.bf16.mxu0 0
          %342 = vmatpush1.bf16.msra.mxu0 0
          %343 = vmatprep.subr.bf16.mxu0 0
          %344 = vmatpush1.bf16.msra.mxu0 0
          %345 = vmatprep.subr.bf16.mxu0 0
          %346 = vmatpush1.bf16.msra.mxu0 0
          %347 = vmatprep.subr.bf16.mxu0 0
          %348 = vmatpush1.bf16.msra.mxu0 0
          %349 = vmatprep.mubr.bf16.mxu0 0
          %350 = vmatmul.mubr.bf16.gmra.mrb[0].mxu0 %v245
          %v351 = vpop.f32.mrb[0].mxu0
          %v352 = vadd.f32 0.0, %v351
          %v353 = vpop.f32.mrb[0].mxu0
          %v354 = vpop.f32.mrb[0].mxu0
          %v355 = vadd.f32 0.0, %v354
          %v356 = vpop.f32.mrb[0].mxu0
          %357 = vmatprep.mubr.bf16.mxu0 0
          %358 = vmatmul.mubr.bf16.gmra.mrb[0].mxu0 %v246
          %v359 = vpop.f32.mrb[0].mxu0
          %v360 = vadd.f32 0.0, %v359
          %v361 = vpop.f32.mrb[0].mxu0
          %v362 = vpop.f32.mrb[0].mxu0
          %v363 = vadd.f32 0.0, %v362
          %v364 = vpop.f32.mrb[0].mxu0
          %365 = vmatprep.mubr.bf16.mxu0 0
          %366 = vmatmul.mubr.bf16.gmra.mrb[0].mxu0 %v247
          %v367 = vpop.f32.mrb[0].mxu0
          %v368 = vadd.f32 0.0, %v367
          %v369 = vpop.f32.mrb[0].mxu0
          %v370 = vpop.f32.mrb[0].mxu0
          %v371 = vadd.f32 0.0, %v370
          %v372 = vpop.f32.mrb[0].mxu0
          %373 = vmatprep.mubr.bf16.mxu0 0
          %374 = vmatmul.mubr.bf16.gmra.mrb[0].mxu0 %v248
          %v375 = vpop.f32.mrb[0].mxu0
          %v376 = vadd.f32 0.0, %v375
          %v377 = vpop.f32.mrb[0].mxu0
          %v378 = vpop.f32.mrb[0].mxu0
          %v379 = vadd.f32 0.0, %v378
          %v380 = vpop.f32.mrb[0].mxu0
          %381 = vmatprep.mubr.bf16.mxu0 0
          %382 = vmatmul.mubr.bf16.gmra.mrb[0].mxu0 %v249
          %v383 = vpop.f32.mrb[0].mxu0
          %v384 = vadd.f32 0.0, %v383
          %v385 = vpop.f32.mrb[0].mxu0
          %v386 = vpop.f32.mrb[0].mxu0
          %v387 = vadd.f32 0.0, %v386
          %v388 = vpop.f32.mrb[0].mxu0
          %389 = vmatprep.mubr.bf16.mxu0 0
          %390 = vmatmul.mubr.bf16.gmra.mrb[0].mxu0 %v250
          %v391 = vpop.f32.mrb[0].mxu0
          %v392 = vadd.f32 0.0, %v391
          %v393 = vpop.f32.mrb[0].mxu0
          %v394 = vpop.f32.mrb[0].mxu0
          %v395 = vadd.f32 0.0, %v394
          %v396 = vpop.f32.mrb[0].mxu0
          %397 = vmatprep.mubr.bf16.mxu0 0
          %398 = vmatmul.mubr.bf16.gmra.mrb[0].mxu0 %v251
          %v399 = vpop.f32.mrb[0].mxu0
          %v400 = vadd.f32 0.0, %v399
          %v401 = vpop.f32.mrb[0].mxu0
          %v402 = vpop.f32.mrb[0].mxu0
          %v403 = vadd.f32 0.0, %v402
          %v404 = vpop.f32.mrb[0].mxu0
          %405 = vmatprep.mubr.bf16.mxu0 0
          %406 = vmatmul.mubr.bf16.gmra.mrb[0].mxu0 %v252
          %v407 = vpop.f32.mrb[0].mxu0
          %v408 = vadd.f32 0.0, %v407
          %v409 = vpop.f32.mrb[0].mxu0
          %v410 = vpop.f32.mrb[0].mxu0
          %v411 = vadd.f32 0.0, %v410
          %v412 = vpop.f32.mrb[0].mxu0
          %413 = vdwg.mxu0
          %v414 = vpack.c.bf16 %v355, %v352
          %v415 = vpack.c.bf16 %v363, %v360
          %v416 = vpack.c.bf16 %v371, %v368
          %v417 = vpack.c.bf16 %v379, %v376
          %v418 = vpack.c.bf16 %v387, %v384
          %v419 = vpack.c.bf16 %v395, %v392
          %v420 = vpack.c.bf16 %v403, %v400
          %v421 = vpack.c.bf16 %v411, %v408
          %422 = vst [vmem:[#allocation3] sm:$0xff] %v414
          %423 = vst [vmem:[#allocation3 + $0x8] sm:$0xff] %v415
          %424 = vst [vmem:[#allocation3 + $0x10] sm:$0xff] %v416
          %425 = vst [vmem:[#allocation3 + $0x18] sm:$0xff] %v417
          %426 = vst [vmem:[#allocation3 + $0x20] sm:$0xff] %v418
          %427 = vst [vmem:[#allocation3 + $0x28] sm:$0xff] %v419
          %428 = vst [vmem:[#allocation3 + $0x30] sm:$0xff] %v420
          %429 = vst [vmem:[#allocation3 + $0x38] sm:$0xff] %v421
        $region53: #{tpu_custom_call.1} parent=31 // pred_fallthru
          _
        %v430 = vld [vmem:[#allocation4] sm:$0xf]
        %v431 = vld [vmem:[#allocation4 + $0x4] sm:$0xf]
        %v432 = vld [vmem:[#allocation4 + $0x8] sm:$0xf]
        %v433 = vld [vmem:[#allocation4 + $0xc] sm:$0xf]
        %v434 = vld [vmem:[#allocation4 + $0x10] sm:$0xf]
        %v435 = vld [vmem:[#allocation4 + $0x14] sm:$0xf]
        %v436 = vld [vmem:[#allocation4 + $0x18] sm:$0xf]
        %v437 = vld [vmem:[#allocation4 + $0x1c] sm:$0xf]
        %v438 = vld [vmem:[#allocation4 + $0x20] sm:$0xf]
        %v439 = vld [vmem:[#allocation4 + $0x24] sm:$0xf]
        %v440 = vld [vmem:[#allocation4 + $0x28] sm:$0xf]
        %v441 = vld [vmem:[#allocation4 + $0x2c] sm:$0xf]
        %v442 = vld [vmem:[#allocation4 + $0x30] sm:$0xf]
        %v443 = vld [vmem:[#allocation4 + $0x34] sm:$0xf]
        %v444 = vld [vmem:[#allocation4 + $0x38] sm:$0xf]
        %v445 = vld [vmem:[#allocation4 + $0x3c] sm:$0xf]
        %v446 = vld [vmem:[#allocation3] sm:$0xff]
        %v447 = vld [vmem:[#allocation3 + $0x8] sm:$0xff]
        %v448 = vld [vmem:[#allocation3 + $0x10] sm:$0xff]
        %v449 = vld [vmem:[#allocation3 + $0x18] sm:$0xff]
        %v450 = vld [vmem:[#allocation3 + $0x20] sm:$0xff]
        %v451 = vld [vmem:[#allocation3 + $0x28] sm:$0xff]
        %v452 = vld [vmem:[#allocation3 + $0x30] sm:$0xff]
        %v453 = vld [vmem:[#allocation3 + $0x38] sm:$0xff]
        %v454 = vld [vmem:[%s218] sm:$0x1]
        %v456 = vlaneseq
        %v457 = vshrl.u32 %v456, 7
        %v458 = vsub.s32 0, %v457
        %v459 = vrot.slane %v454, %v458
        %v477 = vunpack.c.l.b16 %v430
        %v478 = vunpack.c.l.b16 %v431
        %v479 = vunpack.c.l.b16 %v432
        %v480 = vunpack.c.l.b16 %v433
        %v481 = vunpack.c.l.b16 %v434
        %v482 = vunpack.c.l.b16 %v435
        %v483 = vunpack.c.l.b16 %v436
        %v484 = vunpack.c.l.b16 %v437
        %v485 = vunpack.c.l.b16 %v438
        %v486 = vunpack.c.l.b16 %v439
        %v487 = vunpack.c.l.b16 %v440
        %v488 = vunpack.c.l.b16 %v441
        %v489 = vunpack.c.l.b16 %v442
        %v490 = vunpack.c.l.b16 %v443
        %v491 = vunpack.c.l.b16 %v444
        %v492 = vunpack.c.l.b16 %v445
        %v493 = vpack.c.b16 %v478, %v477
        %v494 = vpack.c.b16 %v480, %v479
        %v495 = vpack.c.b16 %v482, %v481
        %v496 = vpack.c.b16 %v484, %v483
        %v497 = vpack.c.b16 %v486, %v485
        %v498 = vpack.c.b16 %v488, %v487
        %v499 = vpack.c.b16 %v490, %v489
        %v500 = vpack.c.b16 %v492, %v491
        %509 = vmatprep.subr.bf16.mxu0 0
        %510 = vmatpush1.bf16.msra.mxu0 %v446
        %511 = vmatprep.subr.bf16.mxu0 0
        %512 = vmatpush1.bf16.msra.mxu0 %v447
        %513 = vmatprep.subr.bf16.mxu0 0
        %514 = vmatpush1.bf16.msra.mxu0 %v448
        %515 = vmatprep.subr.bf16.mxu0 0
        %516 = vmatpush1.bf16.msra.mxu0 %v449
        %517 = vmatprep.subr.bf16.mxu0 0
        %518 = vmatpush1.bf16.msra.mxu0 %v450
        %519 = vmatprep.subr.bf16.mxu0 0
        %520 = vmatpush1.bf16.msra.mxu0 %v451
        %521 = vmatprep.subr.bf16.mxu0 0
        %522 = vmatpush1.bf16.msra.mxu0 %v452
        %523 = vmatprep.subr.bf16.mxu0 0
        %524 = vmatpush1.bf16.msra.mxu0 %v453
        %525 = vmatprep.subr.bf16.mxu0 0
        %526 = vmatpush1.bf16.msra.mxu0 0
        %527 = vmatprep.subr.bf16.mxu0 0
        %528 = vmatpush1.bf16.msra.mxu0 0
        %529 = vmatprep.subr.bf16.mxu0 0
        %530 = vmatpush1.bf16.msra.mxu0 0
        %531 = vmatprep.subr.bf16.mxu0 0
        %532 = vmatpush1.bf16.msra.mxu0 0
        %533 = vmatprep.subr.bf16.mxu0 0
        %534 = vmatpush1.bf16.msra.mxu0 0
        %535 = vmatprep.subr.bf16.mxu0 0
        %536 = vmatpush1.bf16.msra.mxu0 0
        %537 = vmatprep.subr.bf16.mxu0 0
        %538 = vmatpush1.bf16.msra.mxu0 0
        %539 = vmatprep.subr.bf16.mxu0 0
        %540 = vmatpush1.bf16.msra.mxu0 0
        %541 = vmatprep.mubr.bf16.mxu0 0
        %542 = vmatmul.mubr.bf16.gmra.mrb[0].mxu0 %v493
        %v543 = vpop.f32.mrb[0].mxu0
        %v544 = vadd.f32 %v459, %v543
        %v545 = vpop.f32.mrb[0].mxu0
        %v546 = vpop.f32.mrb[0].mxu0
        %v547 = vadd.f32 %v459, %v546
        %v548 = vpop.f32.mrb[0].mxu0
        %549 = vmatprep.mubr.bf16.mxu0 0
        %550 = vmatmul.mubr.bf16.gmra.mrb[0].mxu0 %v494
        %v551 = vpop.f32.mrb[0].mxu0
        %v552 = vadd.f32 %v459, %v551
        %v553 = vpop.f32.mrb[0].mxu0
        %v554 = vpop.f32.mrb[0].mxu0
        %v555 = vadd.f32 %v459, %v554
        %v556 = vpop.f32.mrb[0].mxu0
        %557 = vmatprep.mubr.bf16.mxu0 0
        %558 = vmatmul.mubr.bf16.gmra.mrb[0].mxu0 %v495
        %v559 = vpop.f32.mrb[0].mxu0
        %v560 = vadd.f32 %v459, %v559
        %v561 = vpop.f32.mrb[0].mxu0
        %v562 = vpop.f32.mrb[0].mxu0
        %v563 = vadd.f32 %v459, %v562
        %v564 = vpop.f32.mrb[0].mxu0
        %565 = vmatprep.mubr.bf16.mxu0 0
        %566 = vmatmul.mubr.bf16.gmra.mrb[0].mxu0 %v496
        %v567 = vpop.f32.mrb[0].mxu0
        %v568 = vadd.f32 %v459, %v567
        %v569 = vpop.f32.mrb[0].mxu0
        %v570 = vpop.f32.mrb[0].mxu0
        %v571 = vadd.f32 %v459, %v570
        %v572 = vpop.f32.mrb[0].mxu0
        %573 = vmatprep.mubr.bf16.mxu0 0
        %574 = vmatmul.mubr.bf16.gmra.mrb[0].mxu0 %v497
        %v575 = vpop.f32.mrb[0].mxu0
        %v576 = vadd.f32 %v459, %v575
        %v577 = vpop.f32.mrb[0].mxu0
        %v578 = vpop.f32.mrb[0].mxu0
        %v579 = vadd.f32 %v459, %v578
        %v580 = vpop.f32.mrb[0].mxu0
        %581 = vmatprep.mubr.bf16.mxu0 0
        %582 = vmatmul.mubr.bf16.gmra.mrb[0].mxu0 %v498
        %v583 = vpop.f32.mrb[0].mxu0
        %v584 = vadd.f32 %v459, %v583
        %v585 = vpop.f32.mrb[0].mxu0
        %v586 = vpop.f32.mrb[0].mxu0
        %v587 = vadd.f32 %v459, %v586
        %v588 = vpop.f32.mrb[0].mxu0
        %589 = vmatprep.mubr.bf16.mxu0 0
        %590 = vmatmul.mubr.bf16.gmra.mrb[0].mxu0 %v499
        %v591 = vpop.f32.mrb[0].mxu0
        %v592 = vadd.f32 %v459, %v591
        %v593 = vpop.f32.mrb[0].mxu0
        %v594 = vpop.f32.mrb[0].mxu0
        %v595 = vadd.f32 %v459, %v594
        %v596 = vpop.f32.mrb[0].mxu0
        %597 = vmatprep.mubr.bf16.mxu0 0
        %598 = vmatmul.mubr.bf16.gmra.mrb[0].mxu0 %v500
        %v599 = vpop.f32.mrb[0].mxu0
        %v600 = vadd.f32 %v459, %v599
        %v601 = vpop.f32.mrb[0].mxu0
        %v602 = vpop.f32.mrb[0].mxu0
        %v603 = vadd.f32 %v459, %v602
        %v604 = vpop.f32.mrb[0].mxu0
        %605 = vdwg.mxu0
        %p606 = scmp.lt.s32.totalorder %s24, 1
        // Predicated region
        $region54: #{tpu_custom_call.1} parent=31 // pred_check
          %p607 = pneg %p606
        $region55: #{tpu_custom_call.1} parent=31 // pred_check_branch
          %609 = sbr.rel (%p607) target = $region57
        $region56: #{tpu_custom_call.1} parent=31 // pred_region
          %v610 = vmax.f32 %v544, 0.0
          %v611 = vmax.f32 %v547, 0.0
          %v612 = vmax.f32 %v552, 0.0
          %v613 = vmax.f32 %v555, 0.0
          %v614 = vmax.f32 %v560, 0.0
          %v615 = vmax.f32 %v563, 0.0
          %v616 = vmax.f32 %v568, 0.0
          %v617 = vmax.f32 %v571, 0.0
          %v618 = vmax.f32 %v576, 0.0
          %v619 = vmax.f32 %v579, 0.0
          %v620 = vmax.f32 %v584, 0.0
          %v621 = vmax.f32 %v587, 0.0
          %v622 = vmax.f32 %v592, 0.0
          %v623 = vmax.f32 %v595, 0.0
          %v624 = vmax.f32 %v600, 0.0
          %v625 = vmax.f32 %v603, 0.0
          %v626 = vpack.c.bf16 %v611, %v610
          %v627 = vpack.c.bf16 %v613, %v612
          %v628 = vpack.c.bf16 %v615, %v614
          %v629 = vpack.c.bf16 %v617, %v616
          %v630 = vpack.c.bf16 %v619, %v618
          %v631 = vpack.c.bf16 %v621, %v620
          %v632 = vpack.c.bf16 %v623, %v622
          %v633 = vpack.c.bf16 %v625, %v624
          %s634 = sshra.s32 %s220, 4
          %s635 = sand.u32 %s220, 15
          %s636 = smul.addr %s634, 8
          %s637 = scalar_lea.vmem [#allocation2], %s636
          %638 = vst [vmem:[%s637] sm:$0xff] %v626
          %639 = vst [vmem:[%s637 + $0x8] sm:$0xff] %v627
          %640 = vst [vmem:[%s637 + $0x10] sm:$0xff] %v628
          %641 = vst [vmem:[%s637 + $0x18] sm:$0xff] %v629
          %642 = vst [vmem:[%s637 + $0x20] sm:$0xff] %v630
          %643 = vst [vmem:[%s637 + $0x28] sm:$0xff] %v631
          %644 = vst [vmem:[%s637 + $0x30] sm:$0xff] %v632
          %645 = vst [vmem:[%s637 + $0x38] sm:$0xff] %v633
        $region57: #{tpu_custom_call.1} parent=31 // pred_fallthru
          _
        %p646 = scmp.eq.s32.totalorder %s24, 1
        // Predicated region
        $region58: #{tpu_custom_call.1} parent=31 // pred_check
          %p647 = pneg %p646
        $region59: #{tpu_custom_call.1} parent=31 // pred_check_branch
          %649 = sbr.rel (%p647) target = $region61
        $region60: #{tpu_custom_call.1} parent=31 // pred_region
          %s650 = scalar_lea.vmem [#allocation9], %s220
          %651 = vst [vmem:[%s650] sm:$0xff] %v544
          %652 = vst [vmem:[%s650 + $0x8] sm:$0xff] %v547
          %653 = vst [vmem:[%s650 + $0x10] sm:$0xff] %v552
          %654 = vst [vmem:[%s650 + $0x18] sm:$0xff] %v555
          %655 = vst [vmem:[%s650 + $0x20] sm:$0xff] %v560
          %656 = vst [vmem:[%s650 + $0x28] sm:$0xff] %v563
          %657 = vst [vmem:[%s650 + $0x30] sm:$0xff] %v568
          %658 = vst [vmem:[%s650 + $0x38] sm:$0xff] %v571
          %659 = vst [vmem:[%s650 + $0x40] sm:$0xff] %v576
          %660 = vst [vmem:[%s650 + $0x48] sm:$0xff] %v579
          %661 = vst [vmem:[%s650 + $0x50] sm:$0xff] %v584
          %662 = vst [vmem:[%s650 + $0x58] sm:$0xff] %v587
          %663 = vst [vmem:[%s650 + $0x60] sm:$0xff] %v592
          %664 = vst [vmem:[%s650 + $0x68] sm:$0xff] %v595
          %665 = vst [vmem:[%s650 + $0x70] sm:$0xff] %v600
          %666 = vst [vmem:[%s650 + $0x78] sm:$0xff] %v603
        $region61: #{tpu_custom_call.1} parent=31 // pred_fallthru
          _
        // Predicated region
        $region62: #{tpu_custom_call.1} parent=31 // pred_check
          %p667 = pneg %p118
        $region63: #{tpu_custom_call.1} parent=31 // pred_check_branch
          %669 = sbr.rel (%p667) target = $region65
        $region64: #{tpu_custom_call.1} parent=31 // pred_region
          %s671 = ssub.s32 2048, 2048
          %672 = vsyncadd [#allocation6], %s671
          %s673 = sshll.u32 [#allocation9], 4
          %s674 = int_to_ptr.vmem [resolvable:$true] %s673
          %679 = dma.vmem_to_hbm [thread:$0]  %s674, 2048, %s4, [#allocation6], 128, 128, 8
        $region65: #{tpu_custom_call.1} parent=31 // pred_fallthru
          _
        // Predicated region
        $region66: #{tpu_custom_call.1} parent=31 // pred_check
          %p680 = pneg %p118
        $region67: #{tpu_custom_call.1} parent=31 // pred_check_branch
          %682 = sbr.rel (%p680) target = $region69
        $region68: #{tpu_custom_call.1} parent=31 // pred_region
          %683 = dma.done [#allocation6], 2048
        $region69: #{tpu_custom_call.1} parent=31 // pred_fallthru
          _
      $region32: #{tpu_custom_call.1} parent=5 // pred_fallthru
        _
      %p684 = scmp.le.s32.totalorder 2, %s15
      // Predicated region
      $region70: #{tpu_custom_call.1} parent=5 // pred_check
        %p685 = pneg %p684
      $region71: #{tpu_custom_call.1} parent=5 // pred_check_branch
        %687 = sbr.rel (%p685) target = $region73
      $region72: #{tpu_custom_call.1} parent=5 // pred_region
        %s688 = ssub.s32 %s15, 2
      $region73: #{tpu_custom_call.1} parent=5 // pred_fallthru
        _
    $region6: #{tpu_custom_call.1} parent=1 // loop_footer
      %s19 = sadd.s32 1, %s15
    $region7: #{tpu_custom_call.1} parent=1 // loop_footer_branch
      %14 = sbr.rel target = $region3
    $region8: #{tpu_custom_call.1} parent=1 // loop_exit
      _
    %689 = vsyncpa [#allocation5], 1
    %s690 = scalar_lea.sflag [#allocation5], 1
    %691 = vsyncpa %s690, 1
    %692 = vsyncpa [#allocation8], 1
    %s693 = scalar_lea.sflag [#allocation8], 1
    %694 = vsyncpa %s693, 1
    %695 = vsyncpa [#allocation6], 1
    %s696 = scalar_lea.sflag [#allocation6], 1
    %697 = vsyncpa %s696, 1

</llo_original>
